<compile_context>
chip_gen: v7x
topology: tpu7x:2x2x1
jax: 0.10.0
libtpu: 0.0.40
codegen_flags: <defaults>
</compile_context>

<pallas_src>
import jax
import jax.numpy as jnp
from jax.experimental import pallas as pl
from jax.experimental.pallas import tpu as pltpu

_LANE = 128


def _chip_kind():
    try:
        return jax.devices()[0].device_kind.lower()
    except Exception:
        return ""


def _is_v7x():
    return "7" in _chip_kind()


def _default_block_rows():
    # v7x: 3.2 TB/s HBM but only 64 MiB VMEM -> 4 MiB tiles (8192 f32 rows);
    # double-buffered in+out = 16 MiB, under the 32 MiB default scoped VMEM.
    # v5e/v6e: 2 MiB tiles (4096 rows) already hit ~90% of HBM BW and keep
    # the 4-buffer footprint (8 MiB) under v5e's 16 MiB default scoped VMEM.
    return 8192 if _is_v7x() else 4096


def _small_bypass_elems():
    # Crossover where pallas_call launch + pipeline warm-up loses to plain
    # XLA fusion; higher on v7x because its HBM moves small tensors faster.
    return (1 << 18) if _is_v7x() else (1 << 16)


def _mish_kernel(x_ref, o_ref):
    x = x_ref[...].astype(jnp.float32)
    # tanh(softplus(x)) = (e^2 + 2e) / (e^2 + 2e + 2) = 1 - 2/den,
    # with e = exp(x).  Clamp the exp argument so e^2 cannot overflow f32
    # (the ratio -> 1 there anyway); the outer multiply uses the original x.
    e = jnp.exp(jnp.minimum(x, 20.0))
    den = e * (e + 2.0) + 2.0
    inv = pl.reciprocal(den)  # exact (approx=False): keeps 1e-5 tolerance
    o_ref[...] = (x - (2.0 * x) * inv).astype(o_ref.dtype)


def _mish_jnp(x):
    xf = x.astype(jnp.float32)
    return (xf * jnp.tanh(jnp.logaddexp(xf, 0.0))).astype(x.dtype)


def mish(x, *, block_rows=None, use_pallas=None):
    """Mish(x) = x * tanh(softplus(x)); same shape/dtype as input."""
    n = x.size
    if use_pallas is None:
        use_pallas = n >= _small_bypass_elems()
    if not use_pallas or n == 0:
        return _mish_jnp(x)

    orig_shape, orig_dtype = x.shape, x.dtype
    flat = x.reshape(-1)

    # Lane-aligned prefix goes through Pallas; the (<128-elem) tail, if any,
    # is computed with plain jnp — avoids the old pad+concat+slice extra
    # HBM passes on the rare non-aligned path.
    n_main = (n // _LANE) * _LANE
    if n_main == 0:
        return _mish_jnp(x)

    if block_rows is None:
        block_rows = _default_block_rows()

    rows = n_main // _LANE
    x2d = flat[:n_main].reshape(rows, _LANE)

    if rows > block_rows:
        # Fixed-size blocks; the last (possibly partial) block is handled by
        # Pallas (out-of-bounds writes are masked; op is purely elementwise).
        br = block_rows
        grid = (pl.cdiv(rows, br),)
    else:
        # Slab fits in one block: single full-extent block (always legal).
        br = rows
        grid = (1,)

    out2d = pl.pallas_call(
        _mish_kernel,
        out_shape=jax.ShapeDtypeStruct((rows, _LANE), orig_dtype),
        grid_spec=pltpu.PrefetchScalarGridSpec(
            num_scalar_prefetch=0,
            grid=grid,
            in_specs=[pl.BlockSpec((br, _LANE), lambda i: (i, 0))],
            out_specs=pl.BlockSpec((br, _LANE), lambda i: (i, 0)),
        ),
        compiler_params=pltpu.CompilerParams(
            dimension_semantics=("parallel",),
        ),
    )(x2d)

    out_flat = out2d.reshape(-1)
    if n_main < n:
        tail = _mish_jnp(flat[n_main:])
        out_flat = jnp.concatenate([out_flat, tail])
    return out_flat.reshape(orig_shape)


if __name__ == "__main__":
    key = jax.random.PRNGKey(0)
    # NCHW input, same convention as the PyTorch module would receive.
    x = jax.random.normal(key, (2, 4, 16, 16), dtype=jnp.float32)

    # Force the Pallas path even at this tiny size so the kernel is exercised.
    y = mish(x, use_pallas=True)
    jax.block_until_ready(y)

    ref = x * jnp.tanh(jnp.logaddexp(x, 0.0))
    assert y.shape == x.shape and y.dtype == x.dtype
    assert jnp.max(jnp.abs(y - ref)) < 1e-5

    # Larger activation: exercises the multi-step tiled grid via the auto path.
    xl = jax.random.normal(jax.random.PRNGKey(1), (8, 16, 128, 128), dtype=jnp.float32)
    yl = mish(xl)
    jax.block_until_ready(yl)
    refl = xl * jnp.tanh(jnp.logaddexp(xl, 0.0))
    assert jnp.max(jnp.abs(yl - refl)) < 2e-5

    # Non-lane-aligned size: Pallas prefix + jnp tail path.
    xr = jax.random.normal(jax.random.PRNGKey(2), (2, 131), dtype=jnp.float32)
    yr = mish(xr, use_pallas=True)
    jax.block_until_ready(yr)
    refr = xr * jnp.tanh(jnp.logaddexp(xr, 0.0))
    assert yr.shape == xr.shape and yr.dtype == xr.dtype
    assert jnp.max(jnp.abs(yr - refr)) < 1e-5

    print("KERNEL_OK")
</pallas_src>

<mosaic_0001>
module attributes {stable_mosaic.version = 11 : i64} {
  func.func @_mish_kernel(%arg0: i32, %arg1: memref<16x128xf32, #tpu.memory_space<vmem>>, %arg2: memref<16x128xf32, #tpu.memory_space<vmem>>) attributes {dimension_semantics = [#tpu.dimension_semantics<parallel>], iteration_bounds = array<i64: 1>, scalar_prefetch = 0 : i64, scratch_operands = 0 : i64, tpu.core_type = #tpu.core_type<tc>, window_params = [{transform_indices = @transform_0, window_bounds = array<i64: 16, 128>}, {transform_indices = @transform_1, window_bounds = array<i64: 16, 128>}]} {
    %c0 = arith.constant 0 : index
    %c0_0 = arith.constant 0 : index
    %0 = vector.load %arg1[%c0, %c0_0] : memref<16x128xf32, #tpu.memory_space<vmem>>, vector<16x128xf32>
    %cst = arith.constant 2.000000e+01 : f32
    %1 = vector.broadcast %cst : f32 to vector<16x128xf32>
    %2 = arith.minimumf %0, %1 : vector<16x128xf32>
    %3 = math.exp %2 : vector<16x128xf32>
    %cst_1 = arith.constant 2.000000e+00 : f32
    %4 = vector.broadcast %cst_1 : f32 to vector<16x128xf32>
    %5 = arith.addf %3, %4 : vector<16x128xf32>
    %6 = arith.mulf %3, %5 : vector<16x128xf32>
    %cst_2 = arith.constant 2.000000e+00 : f32
    %7 = vector.broadcast %cst_2 : f32 to vector<16x128xf32>
    %8 = arith.addf %6, %7 : vector<16x128xf32>
    %9 = tpu.reciprocal %8 : vector<16x128xf32> -> vector<16x128xf32>
    %cst_3 = arith.constant 2.000000e+00 : f32
    %10 = vector.broadcast %cst_3 : f32 to vector<16x128xf32>
    %11 = arith.mulf %10, %0 : vector<16x128xf32>
    %12 = arith.mulf %11, %9 : vector<16x128xf32>
    %13 = arith.subf %0, %12 : vector<16x128xf32>
    %c0_4 = arith.constant 0 : index
    %c0_5 = arith.constant 0 : index
    %14 = vector.load %arg2[%c0_4, %c0_5] : memref<16x128xf32, #tpu.memory_space<vmem>>, vector<16x128xf32>
    tpu.vector_store %arg2[%c0_4, %c0_5], %13 {strides = array<i32>} : memref<16x128xf32, #tpu.memory_space<vmem>>, vector<16x128xf32>,
    return
  }
  func.func @transform_0(%arg0: i32) -> (i32, i32) {
    %c0_i32 = arith.constant 0 : i32
    %c0_i32_0 = arith.constant 0 : i32
    return %arg0, %c0_i32 : i32, i32
  }
  func.func @transform_1(%arg0: i32) -> (i32, i32) {
    %c0_i32 = arith.constant 0 : i32
    %c0_i32_0 = arith.constant 0 : i32
    return %arg0, %c0_i32 : i32, i32
  }
}

</mosaic_0001>

<llo_original>
// kernel: tpu_custom_call.1
$region0: #{tpu_custom_call.1}
  #allocation0 [shape = 'u32[]', space=smem, size = 0x4, offset = 0x4, fixed_abs, tag = 'smem constant byte address 0x4 - core index']
  #allocation1 [shape = 'u32[144,128]{1,0:T(1,128)}', space=vmem, size = 0x12000, scoped, tag = 'internal scratch']
  %s0 = inlined_call_operand.hbm [shape: f32[16,128], index: 0, kind: input, shape index: {}]
  %s1 = inlined_call_operand.hbm [shape: f32[16,128], index: 1, kind: output, shape index: {}]
  %s2 = sld [smem:[#allocation0]]
  $region18: #{tpu_custom_call.1} parent=0
    _
  %s4 = ssub.s32 1, %s2
  %s5 = scalar_select 0, %s4, %s2
  $region1: #{tpu_custom_call.1} parent=0
    #allocation2 [shape = 'u8[8192]{0}', space=vmem, size = 0x2000, scoped, tag = 'input window, operand 0, single buffered']
    #allocation3 [shape = 's32[1]{0}', space=sflag, size = 0x4, scoped, tag = 'scoped memory for tpu_custom_call.1']
    #allocation4 [shape = 's32[1]{0}', space=sflag, size = 0x4, scoped, tag = 'scoped memory for tpu_custom_call.1']
    #allocation5 [shape = 'u8[8192]{0}', space=vmem, size = 0x2000, scoped, tag = 'output window, operand 0, single buffered']
    %6 = vsyncpa [#allocation3], 0
    %7 = vsyncpa [#allocation4], 0
    // Predicated region
    $region2: #{tpu_custom_call.1} parent=1 // pred_check
      _
    $region3: #{tpu_custom_call.1} parent=1 // pred_check_branch
      %9 = sbr.rel (0) target = $region5
    $region4: #{tpu_custom_call.1} parent=1 // pred_region
      %s11 = ssub.s32 256, 256
      %12 = vsyncadd [#allocation3], %s11
      %s13 = sshll.u32 [#allocation2], 4
      %s14 = int_to_ptr.vmem [resolvable:$true] %s13
      %19 = dma.hbm_to_vmem [thread:$0]  %s0, 256, %s14, [#allocation3], 128, 128, 8
    $region5: #{tpu_custom_call.1} parent=1 // pred_fallthru
      _
    // Predicated region
    $region6: #{tpu_custom_call.1} parent=1 // pred_check
      _
    $region7: #{tpu_custom_call.1} parent=1 // pred_check_branch
      %21 = sbr.rel (0) target = $region9
    $region8: #{tpu_custom_call.1} parent=1 // pred_region
      %22 = dma.done [#allocation3], 256
    $region9: #{tpu_custom_call.1} parent=1 // pred_fallthru
      _
    %v23 = vld [vmem:[#allocation2] sm:$0xff]
    %v24 = vld [vmem:[#allocation2 + $0x8] sm:$0xff]
    %v25 = vmin.f32 %v23, 20.0
    %v26 = vmin.f32 %v24, 20.0
    %v27 = vmul.f32 %v25, 1.442695
    %v28 = vpow.pop %v27
    %v29 = vmul.f32 %v26, 1.442695
    %v30 = vpow.pop %v29
    %v31 = vadd.f32 %v28, 2.0
    %v32 = vadd.f32 %v30, 2.0
    %v33 = vmul.f32 %v28, %v31
    %v34 = vmul.f32 %v30, %v32
    %v35 = vadd.f32 %v33, 2.0
    %v36 = vadd.f32 %v34, 2.0
    %v37 = vrcp.pop %v35
    %v38 = vrcp.pop %v36
    %v39 = vmul.f32 %v23, 2.0
    %v40 = vmul.f32 %v24, 2.0
    %v41 = vmul.f32 %v39, %v37
    %v42 = vmul.f32 %v40, %v38
    %v43 = vsub.f32 %v23, %v41
    %v44 = vsub.f32 %v24, %v42
    %45 = vst [vmem:[#allocation5] sm:$0xff] %v43
    %46 = vst [vmem:[#allocation5 + $0x8] sm:$0xff] %v44
    // Predicated region
    $region10: #{tpu_custom_call.1} parent=1 // pred_check
      _
    $region11: #{tpu_custom_call.1} parent=1 // pred_check_branch
      %48 = sbr.rel (0) target = $region13
    $region12: #{tpu_custom_call.1} parent=1 // pred_region
      %s50 = ssub.s32 256, 256
      %51 = vsyncadd [#allocation4], %s50
      %s52 = sshll.u32 [#allocation5], 4
      %s53 = int_to_ptr.vmem [resolvable:$true] %s52
      %58 = dma.vmem_to_hbm [thread:$0]  %s53, 256, %s1, [#allocation4], 128, 128, 8
    $region13: #{tpu_custom_call.1} parent=1 // pred_fallthru
      _
    // Predicated region
    $region14: #{tpu_custom_call.1} parent=1 // pred_check
      _
    $region15: #{tpu_custom_call.1} parent=1 // pred_check_branch
      %60 = sbr.rel (0) target = $region17
    $region16: #{tpu_custom_call.1} parent=1 // pred_region
      %61 = dma.done [#allocation4], 256
    $region17: #{tpu_custom_call.1} parent=1 // pred_fallthru
      _
    %62 = vsyncpa [#allocation3], 1
    %63 = vsyncpa [#allocation4], 1

</llo_original>
